<compile_context>
chip_gen: v6e
topology: v6e:2x2x1
jax: 0.10.0
libtpu: 0.0.40
codegen_flags: <defaults>
</compile_context>

<pallas_src>
import functools
import math

import jax
import jax.numpy as jnp
from jax import lax
from jax.experimental import pallas as pl
from jax.experimental.pallas import tpu as pltpu


_INV_SQRT2 = 1.0 / math.sqrt(2.0)


def _erf_approx(z):
    """erf via Abramowitz & Stegun 7.1.26 (max abs error ~1.5e-7)."""
    a1, a2, a3, a4, a5 = (0.254829592, -0.284496736, 1.421413741,
                          -1.453152027, 1.061405429)
    p = 0.3275911
    za = jnp.abs(z)
    t = 1.0 / (1.0 + p * za)
    poly = ((((a5 * t + a4) * t + a3) * t + a2) * t + a1) * t
    e = 1.0 - poly * jnp.exp(-za * za)
    return jnp.where(z >= 0.0, e, -e)


def _fcu_down_kernel(xw_ref, cls_ref, w_ref, b_ref, g_ref, beta_ref, o_ref, *,
                     inv_pool, eps):
    # xw_ref  : (ss, S, Cin)  pooling-window axis first; S = 1 + Np, row 0 is a
    #           zero pad that will be overwritten by the cls token.
    # cls_ref : (1, Cout)     x_t[:, 0]
    # w_ref   : (Cin, Cout)   1x1-conv weight (pre-transposed)
    # b_ref   : (1, Cout)     conv bias
    # g_ref   : (1, Cout)     LayerNorm gamma
    # beta_ref: (1, Cout)     LayerNorm beta
    # o_ref   : (S, Cout)
    xw = xw_ref[...]

    # AvgPool2d: sum over the leading window axis (elementwise VPU adds over
    # ss slabs — no cross-lane/sublane relayout), then scale.
    pooled = jnp.sum(xw, axis=0) * inv_pool                      # (S, Cin)

    # 1x1 conv == one MXU matmul over the channel axis, f32 accumulation.
    y = jnp.dot(pooled, w_ref[...], preferred_element_type=jnp.float32)
    y = y + b_ref[...]

    # LayerNorm over channels (eps matches nn.LayerNorm(eps=1e-6)).
    mu = jnp.mean(y, axis=-1, keepdims=True)
    var = jnp.mean(jnp.square(y - mu), axis=-1, keepdims=True)
    y = (y - mu) * lax.rsqrt(var + eps)
    y = y * g_ref[...] + beta_ref[...]

    # Exact GELU: 0.5 * x * (1 + erf(x / sqrt(2))).
    y = 0.5 * y * (1.0 + _erf_approx(y * _INV_SQRT2))

    # Prepend the cls token: select row 0 <- cls instead of an in-kernel
    # concatenate, so the output write stays dense and unmasked.
    row = lax.broadcasted_iota(jnp.int32, (y.shape[0], 1), 0)
    o_ref[...] = jnp.where(row == 0, cls_ref[...], y).astype(o_ref.dtype)


def fcu_down(x, x_t, w_conv, b_conv, ln_gamma, ln_beta, *, dw_stride, eps=1e-6):
    """FCUDown forward.

    x       : (B, Cin, H, W)  CNN feature map (PyTorch channels-first layout)
    x_t     : (B, Nt, Cout)   transformer tokens; only x_t[:, 0] (cls) is used
    w_conv  : (Cin, Cout)     torch Conv2d weight (Cout, Cin, 1, 1) transposed
    b_conv  : (Cout,)         conv bias
    ln_gamma: (Cout,)         LayerNorm weight
    ln_beta : (Cout,)         LayerNorm bias
    returns : (B, 1 + (H // dw_stride) * (W // dw_stride), Cout)
    """
    B, Cin, H, W = x.shape
    Cout = w_conv.shape[1]
    s = dw_stride
    Hp, Wp = H // s, W // s
    Np = Hp * Wp
    S = Np + 1
    ss = s * s

    # Wrapper-side layout plumbing (pure XLA reshapes/transposes, no compute):
    # channels-last, pooling-window axis first, plus one zero row for the cls
    # slot so the kernel writes a single dense (S, Cout) block per batch elem.
    xw = jnp.transpose(x, (0, 2, 3, 1))                       # (B, H, W, Cin)
    xw = xw.reshape(B, Hp, s, Wp, s, Cin)
    xw = jnp.transpose(xw, (0, 2, 4, 1, 3, 5))                # (B, s, s, Hp, Wp, Cin)
    xw = xw.reshape(B, ss, Np, Cin)
    xw = jnp.pad(xw, ((0, 0), (0, 0), (1, 0), (0, 0)))        # (B, ss, S, Cin)

    cls = x_t[:, :1, :]                                        # (B, 1, Cout)
    b2 = b_conv.reshape(1, Cout)
    g2 = ln_gamma.reshape(1, Cout)
    be2 = ln_beta.reshape(1, Cout)

    kernel = functools.partial(_fcu_down_kernel,
                               inv_pool=1.0 / float(ss), eps=float(eps))

    return pl.pallas_call(
        kernel,
        out_shape=jax.ShapeDtypeStruct((B, S, Cout), x.dtype),
        grid_spec=pltpu.PrefetchScalarGridSpec(
            num_scalar_prefetch=0,
            grid=(B,),
            in_specs=[
                # leading size-1 batch dims are squeezed (None) out of the refs
                pl.BlockSpec((None, ss, S, Cin), lambda b: (b, 0, 0, 0)),  # xw
                pl.BlockSpec((None, 1, Cout), lambda b: (b, 0, 0)),        # cls
                pl.BlockSpec((Cin, Cout), lambda b: (0, 0)),               # w_conv
                pl.BlockSpec((1, Cout), lambda b: (0, 0)),                 # b_conv
                pl.BlockSpec((1, Cout), lambda b: (0, 0)),                 # ln_gamma
                pl.BlockSpec((1, Cout), lambda b: (0, 0)),                 # ln_beta
            ],
            out_specs=pl.BlockSpec((None, S, Cout), lambda b: (b, 0, 0)),
        ),
        compiler_params=pltpu.CompilerParams(
            dimension_semantics=("parallel",)),
    )(xw, cls, w_conv, b2, g2, be2)


def _reference(x, x_t, w_conv, b_conv, ln_gamma, ln_beta, *, dw_stride, eps=1e-6):
    """Pure-JAX mirror of the PyTorch module, op-for-op (conv -> pool -> ...)."""
    B, Cin, H, W = x.shape
    Cout = w_conv.shape[1]
    s = dw_stride
    y = jnp.einsum('bchw,cd->bdhw', x, w_conv) + b_conv[None, :, None, None]
    y = y.reshape(B, Cout, H // s, s, W // s, s).mean(axis=(3, 5))
    y = y.reshape(B, Cout, -1).transpose(0, 2, 1)              # (B, Np, Cout)
    mu = y.mean(axis=-1, keepdims=True)
    var = ((y - mu) ** 2).mean(axis=-1, keepdims=True)
    y = (y - mu) / jnp.sqrt(var + eps) * ln_gamma + ln_beta
    y = 0.5 * y * (1.0 + lax.erf(y * (1.0 / math.sqrt(2.0))))  # exact GELU
    return jnp.concatenate([x_t[:, :1, :], y], axis=1)


if __name__ == "__main__":
    B = 2
    Cin = 16          # in_planes
    Cout = 32         # out_planes (embed dim)
    H = W = 16
    dw_stride = 4
    Nt = 17           # token count of x_t (only the cls token is used)

    key = jax.random.PRNGKey(0)
    kx, kt, kw, kb, kg, kbe = jax.random.split(key, 6)

    x = jax.random.normal(kx, (B, Cin, H, W), dtype=jnp.float32)
    x_t = jax.random.normal(kt, (B, Nt, Cout), dtype=jnp.float32)

    # torch Conv2d(in, out, 1) weight is (Cout, Cin, 1, 1); stored pre-transposed.
    w_conv = 0.1 * jax.random.normal(kw, (Cin, Cout), dtype=jnp.float32)
    b_conv = 0.05 * jax.random.normal(kb, (Cout,), dtype=jnp.float32)
    ln_gamma = 1.0 + 0.1 * jax.random.normal(kg, (Cout,), dtype=jnp.float32)
    ln_beta = 0.05 * jax.random.normal(kbe, (Cout,), dtype=jnp.float32)

    out = fcu_down(x, x_t, w_conv, b_conv, ln_gamma, ln_beta, dw_stride=dw_stride)
    out = jax.block_until_ready(out)

    ref = _reference(x, x_t, w_conv, b_conv, ln_gamma, ln_beta,
                     dw_stride=dw_stride)
    Np = (H // dw_stride) * (W // dw_stride)
    assert out.shape == (B, Np + 1, Cout)
    err = float(jnp.max(jnp.abs(out - ref)))
    assert jnp.allclose(out, ref, atol=2e-4, rtol=2e-4), err

    print("KERNEL_OK")
</pallas_src>

<mosaic_0001>
module attributes {stable_mosaic.version = 11 : i64} {
  func.func @_fcu_down_kernel(%arg0: i32, %arg1: memref<1x16x17x16xf32, #tpu.memory_space<vmem>>, %arg2: memref<1x1x32xf32, #tpu.memory_space<vmem>>, %arg3: memref<16x32xf32, #tpu.memory_space<vmem>>, %arg4: memref<1x32xf32, #tpu.memory_space<vmem>>, %arg5: memref<1x32xf32, #tpu.memory_space<vmem>>, %arg6: memref<1x32xf32, #tpu.memory_space<vmem>>, %arg7: memref<1x17x32xf32, #tpu.memory_space<vmem>>) attributes {dimension_semantics = [#tpu.dimension_semantics<parallel>], iteration_bounds = array<i64: 2>, scalar_prefetch = 0 : i64, scratch_operands = 0 : i64, tpu.core_type = #tpu.core_type<tc>, window_params = [{transform_indices = @transform_0, window_bounds = array<i64: 1, 16, 17, 16>}, {transform_indices = @transform_1, window_bounds = array<i64: 1, 1, 32>}, {pipeline_mode = #tpu.pipeline_mode<synchronous>, transform_indices = @transform_2, window_bounds = array<i64: 16, 32>}, {pipeline_mode = #tpu.pipeline_mode<synchronous>, transform_indices = @transform_3, window_bounds = array<i64: 1, 32>}, {pipeline_mode = #tpu.pipeline_mode<synchronous>, transform_indices = @transform_4, window_bounds = array<i64: 1, 32>}, {pipeline_mode = #tpu.pipeline_mode<synchronous>, transform_indices = @transform_5, window_bounds = array<i64: 1, 32>}, {transform_indices = @transform_6, window_bounds = array<i64: 1, 17, 32>}]} {
    %c0 = arith.constant 0 : index
    %c0_0 = arith.constant 0 : index
    %c0_1 = arith.constant 0 : index
    %c0_2 = arith.constant 0 : index
    %0 = vector.load %arg1[%c0, %c0_0, %c0_1, %c0_2] : memref<1x16x17x16xf32, #tpu.memory_space<vmem>>, vector<1x16x17x16xf32>
    %1 = vector.shape_cast %0 : vector<1x16x17x16xf32> to vector<16x17x16xf32>
    %cst = arith.constant dense<0.000000e+00> : vector<17x16xf32>
    %2 = vector.multi_reduction <add>, %1, %cst [0] : vector<16x17x16xf32> to vector<17x16xf32>
    %cst_3 = arith.constant 6.250000e-02 : f32
    %3 = vector.broadcast %cst_3 : f32 to vector<17x16xf32>
    %4 = arith.mulf %2, %3 : vector<17x16xf32>
    %c0_4 = arith.constant 0 : index
    %c0_5 = arith.constant 0 : index
    %5 = vector.load %arg3[%c0_4, %c0_5] : memref<16x32xf32, #tpu.memory_space<vmem>>, vector<16x32xf32>
    %cst_6 = arith.constant dense<0.000000e+00> : vector<17x32xf32>
    %6 = tpu.matmul %4, %5, %cst_6 {dimension_numbers = #tpu.dot_dimension_numbers<[1], [0], [0], [1], [0, 0, 1, 1], [], []>} : vector<17x16xf32>, vector<16x32xf32>, vector<17x32xf32> -> vector<17x32xf32>
    %c0_7 = arith.constant 0 : index
    %c0_8 = arith.constant 0 : index
    %7 = vector.load %arg4[%c0_7, %c0_8] : memref<1x32xf32, #tpu.memory_space<vmem>>, vector<1x32xf32>
    %8 = vector.broadcast %7 : vector<1x32xf32> to vector<17x32xf32>
    %9 = arith.addf %6, %8 : vector<17x32xf32>
    %cst_9 = arith.constant dense<0.000000e+00> : vector<17xf32>
    %10 = vector.multi_reduction <add>, %9, %cst_9 [1] : vector<17x32xf32> to vector<17xf32>
    %11 = vector.shape_cast %10 : vector<17xf32> to vector<17x1xf32>
    %cst_10 = arith.constant 3.200000e+01 : f32
    %12 = vector.broadcast %cst_10 : f32 to vector<17x1xf32>
    %13 = arith.divf %11, %12 : vector<17x1xf32>
    %14 = vector.broadcast %13 : vector<17x1xf32> to vector<17x32xf32>
    %15 = arith.subf %9, %14 : vector<17x32xf32>
    %16 = arith.mulf %15, %15 : vector<17x32xf32>
    %cst_11 = arith.constant dense<0.000000e+00> : vector<17xf32>
    %17 = vector.multi_reduction <add>, %16, %cst_11 [1] : vector<17x32xf32> to vector<17xf32>
    %18 = vector.shape_cast %17 : vector<17xf32> to vector<17x1xf32>
    %cst_12 = arith.constant 3.200000e+01 : f32
    %19 = vector.broadcast %cst_12 : f32 to vector<17x1xf32>
    %20 = arith.divf %18, %19 : vector<17x1xf32>
    %21 = vector.broadcast %13 : vector<17x1xf32> to vector<17x32xf32>
    %22 = arith.subf %9, %21 : vector<17x32xf32>
    %cst_13 = arith.constant 9.99999997E-7 : f32
    %23 = vector.broadcast %cst_13 : f32 to vector<17x1xf32>
    %24 = arith.addf %20, %23 : vector<17x1xf32>
    %25 = math.rsqrt %24 : vector<17x1xf32>
    %26 = vector.broadcast %25 : vector<17x1xf32> to vector<17x32xf32>
    %27 = arith.mulf %22, %26 : vector<17x32xf32>
    %c0_14 = arith.constant 0 : index
    %c0_15 = arith.constant 0 : index
    %28 = vector.load %arg5[%c0_14, %c0_15] : memref<1x32xf32, #tpu.memory_space<vmem>>, vector<1x32xf32>
    %29 = vector.broadcast %28 : vector<1x32xf32> to vector<17x32xf32>
    %30 = arith.mulf %27, %29 : vector<17x32xf32>
    %c0_16 = arith.constant 0 : index
    %c0_17 = arith.constant 0 : index
    %31 = vector.load %arg6[%c0_16, %c0_17] : memref<1x32xf32, #tpu.memory_space<vmem>>, vector<1x32xf32>
    %32 = vector.broadcast %31 : vector<1x32xf32> to vector<17x32xf32>
    %33 = arith.addf %30, %32 : vector<17x32xf32>
    %cst_18 = arith.constant 5.000000e-01 : f32
    %34 = vector.broadcast %cst_18 : f32 to vector<17x32xf32>
    %35 = arith.mulf %34, %33 : vector<17x32xf32>
    %cst_19 = arith.constant 0.707106769 : f32
    %36 = vector.broadcast %cst_19 : f32 to vector<17x32xf32>
    %37 = arith.mulf %33, %36 : vector<17x32xf32>
    %38 = math.absf %37 : vector<17x32xf32>
    %cst_20 = arith.constant 0.327591091 : f32
    %39 = vector.broadcast %cst_20 : f32 to vector<17x32xf32>
    %40 = arith.mulf %39, %38 : vector<17x32xf32>
    %cst_21 = arith.constant 1.000000e+00 : f32
    %41 = vector.broadcast %cst_21 : f32 to vector<17x32xf32>
    %42 = arith.addf %41, %40 : vector<17x32xf32>
    %cst_22 = arith.constant 1.000000e+00 : f32
    %43 = vector.broadcast %cst_22 : f32 to vector<17x32xf32>
    %44 = arith.divf %43, %42 : vector<17x32xf32>
    %cst_23 = arith.constant 1.06140542 : f32
    %45 = vector.broadcast %cst_23 : f32 to vector<17x32xf32>
    %46 = arith.mulf %45, %44 : vector<17x32xf32>
    %cst_24 = arith.constant -1.45315206 : f32
    %47 = vector.broadcast %cst_24 : f32 to vector<17x32xf32>
    %48 = arith.addf %46, %47 : vector<17x32xf32>
    %49 = arith.mulf %48, %44 : vector<17x32xf32>
    %cst_25 = arith.constant 1.42141378 : f32
    %50 = vector.broadcast %cst_25 : f32 to vector<17x32xf32>
    %51 = arith.addf %49, %50 : vector<17x32xf32>
    %52 = arith.mulf %51, %44 : vector<17x32xf32>
    %cst_26 = arith.constant -0.284496725 : f32
    %53 = vector.broadcast %cst_26 : f32 to vector<17x32xf32>
    %54 = arith.addf %52, %53 : vector<17x32xf32>
    %55 = arith.mulf %54, %44 : vector<17x32xf32>
    %cst_27 = arith.constant 0.254829586 : f32
    %56 = vector.broadcast %cst_27 : f32 to vector<17x32xf32>
    %57 = arith.addf %55, %56 : vector<17x32xf32>
    %58 = arith.mulf %57, %44 : vector<17x32xf32>
    %cst_28 = arith.constant 0.000000e+00 : f32
    %59 = vector.broadcast %cst_28 : f32 to vector<17x32xf32>
    %60 = arith.subf %59, %38 : vector<17x32xf32>
    %61 = arith.mulf %60, %38 : vector<17x32xf32>
    %62 = math.exp %61 : vector<17x32xf32>
    %63 = arith.mulf %58, %62 : vector<17x32xf32>
    %cst_29 = arith.constant 1.000000e+00 : f32
    %64 = vector.broadcast %cst_29 : f32 to vector<17x32xf32>
    %65 = arith.subf %64, %63 : vector<17x32xf32>
    %cst_30 = arith.constant 0.000000e+00 : f32
    %66 = vector.broadcast %cst_30 : f32 to vector<17x32xf32>
    %67 = arith.cmpf oge, %37, %66 : vector<17x32xf32>
    %cst_31 = arith.constant 0.000000e+00 : f32
    %68 = vector.broadcast %cst_31 : f32 to vector<17x32xf32>
    %69 = arith.subf %68, %65 : vector<17x32xf32>
    %70 = arith.select %67, %65, %69 : vector<17x32xi1>, vector<17x32xf32>
    %cst_32 = arith.constant 1.000000e+00 : f32
    %71 = vector.broadcast %cst_32 : f32 to vector<17x32xf32>
    %72 = arith.addf %71, %70 : vector<17x32xf32>
    %73 = arith.mulf %35, %72 : vector<17x32xf32>
    %74 = tpu.iota {dimensions = array<i32: 0>} : vector<17x1xi32>
    %c0_i32 = arith.constant 0 : i32
    %75 = vector.broadcast %c0_i32 : i32 to vector<17x1xi32>
    %76 = arith.cmpi eq, %74, %75 : vector<17x1xi32>
    %c0_33 = arith.constant 0 : index
    %c0_34 = arith.constant 0 : index
    %c0_35 = arith.constant 0 : index
    %77 = vector.load %arg2[%c0_33, %c0_34, %c0_35] : memref<1x1x32xf32, #tpu.memory_space<vmem>>, vector<1x1x32xf32>
    %78 = vector.shape_cast %77 : vector<1x1x32xf32> to vector<1x32xf32>
    %79 = vector.shape_cast %76 : vector<17x1xi1> to vector<17x1xi1>
    %80 = vector.broadcast %79 : vector<17x1xi1> to vector<17x32xi1>
    %81 = vector.shape_cast %78 : vector<1x32xf32> to vector<1x32xf32>
    %82 = vector.broadcast %81 : vector<1x32xf32> to vector<17x32xf32>
    %83 = arith.select %80, %82, %73 : vector<17x32xi1>, vector<17x32xf32>
    %c0_36 = arith.constant 0 : index
    %c0_37 = arith.constant 0 : index
    %c0_38 = arith.constant 0 : index
    %84 = vector.load %arg7[%c0_36, %c0_37, %c0_38] : memref<1x17x32xf32, #tpu.memory_space<vmem>>, vector<1x17x32xf32>
    %85 = vector.shape_cast %84 : vector<1x17x32xf32> to vector<17x32xf32>
    %86 = vector.shape_cast %83 : vector<17x32xf32> to vector<1x17x32xf32>
    tpu.vector_store %arg7[%c0_36, %c0_37, %c0_38], %86 {strides = array<i32>} : memref<1x17x32xf32, #tpu.memory_space<vmem>>, vector<1x17x32xf32>,
    return
  }
  func.func @transform_0(%arg0: i32) -> (i32, i32, i32, i32) {
    %c0_i32 = arith.constant 0 : i32
    %c0_i32_0 = arith.constant 0 : i32
    %c0_i32_1 = arith.constant 0 : i32
    %c0_i32_2 = arith.constant 0 : i32
    return %arg0, %c0_i32, %c0_i32_0, %c0_i32_1 : i32, i32, i32, i32
  }
  func.func @transform_1(%arg0: i32) -> (i32, i32, i32) {
    %c0_i32 = arith.constant 0 : i32
    %c0_i32_0 = arith.constant 0 : i32
    %c0_i32_1 = arith.constant 0 : i32
    return %arg0, %c0_i32, %c0_i32_0 : i32, i32, i32
  }
  func.func @transform_2(%arg0: i32) -> (i32, i32) {
    %c0_i32 = arith.constant 0 : i32
    %c0_i32_0 = arith.constant 0 : i32
    %c0_i32_1 = arith.constant 0 : i32
    return %c0_i32, %c0_i32_0 : i32, i32
  }
  func.func @transform_3(%arg0: i32) -> (i32, i32) {
    %c0_i32 = arith.constant 0 : i32
    %c0_i32_0 = arith.constant 0 : i32
    %c0_i32_1 = arith.constant 0 : i32
    return %c0_i32, %c0_i32_0 : i32, i32
  }
  func.func @transform_4(%arg0: i32) -> (i32, i32) {
    %c0_i32 = arith.constant 0 : i32
    %c0_i32_0 = arith.constant 0 : i32
    %c0_i32_1 = arith.constant 0 : i32
    return %c0_i32, %c0_i32_0 : i32, i32
  }
  func.func @transform_5(%arg0: i32) -> (i32, i32) {
    %c0_i32 = arith.constant 0 : i32
    %c0_i32_0 = arith.constant 0 : i32
    %c0_i32_1 = arith.constant 0 : i32
    return %c0_i32, %c0_i32_0 : i32, i32
  }
  func.func @transform_6(%arg0: i32) -> (i32, i32, i32) {
    %c0_i32 = arith.constant 0 : i32
    %c0_i32_0 = arith.constant 0 : i32
    %c0_i32_1 = arith.constant 0 : i32
    return %arg0, %c0_i32, %c0_i32_0 : i32, i32, i32
  }
}

</mosaic_0001>

<llo_original>
// kernel: tpu_custom_call.1
$region0: #{tpu_custom_call.1}
  #allocation0 [shape = 'u32[]', space=smem, size = 0x4, offset = 0x4, fixed_abs, tag = 'smem constant byte address 0x4 - core index']
  #allocation1 [shape = 'u32[144,128]{1,0:T(1,128)}', space=vmem, size = 0x12000, scoped, tag = 'internal scratch']
  %s0 = inlined_call_operand.vmem [shape: f32[2,16,17,16], index: 0, kind: input, shape index: {}]
  %s1 = inlined_call_operand.vmem [shape: f32[2,1,32], index: 1, kind: input, shape index: {}]
  %s2 = inlined_call_operand.vmem [shape: f32[16,32], index: 2, kind: input, shape index: {}]
  %s3 = inlined_call_operand.vmem [shape: f32[1,32], index: 3, kind: input, shape index: {}]
  %s4 = inlined_call_operand.vmem [shape: f32[1,32], index: 4, kind: input, shape index: {}]
  %s5 = inlined_call_operand.vmem [shape: f32[1,32], index: 5, kind: input, shape index: {}]
  %s6 = inlined_call_operand.vmem [shape: f32[2,17,32], index: 6, kind: output, shape index: {}]
  %s7 = sld [smem:[#allocation0]]
  $region57: #{tpu_custom_call.1} parent=0
    _
  %s9 = ssub.s32 1, %s7
  %s10 = scalar_select 0, %s9, %s7
  loop: start=0, step=1, limit=4
  $region2: #{tpu_custom_call.1} parent=0 // loop_pre_header
    _
  $region3: #{tpu_custom_call.1} parent=0 // loop_header
    %s12 = sphi 0, %s16
    %p13 = scmp.ge.s32.totalorder %s12, 4
    %s22 = sphi 0, %s24
    %s25 = sphi 0, %s22
    %s26 = sphi 0, %s25
    %s42 = sphi 0, %s26
    %s48 = sphi 0, %s50
    %s51 = sphi 0, %s48
    %s52 = sphi 0, %s51
    %s68 = sphi 0, %s52
    %s72 = sphi 0, %s72
    %s74 = sphi 0, %s72
    %s75 = sphi 0, %s74
    %s89 = sphi 0, %s75
    %s93 = sphi 0, %s93
    %s95 = sphi 0, %s93
    %s96 = sphi 0, %s95
    %s110 = sphi 0, %s96
    %s114 = sphi 0, %s114
    %s116 = sphi 0, %s114
    %s117 = sphi 0, %s116
    %s131 = sphi 0, %s117
    %s135 = sphi 0, %s135
    %s137 = sphi 0, %s135
    %s138 = sphi 0, %s137
    %s152 = sphi 0, %s138
    %s158 = sphi 0, %s160
    %s161 = sphi 0, %s158
    %s162 = sphi 0, %s161
    %s178 = sphi 0, %s162
  $region4: #{tpu_custom_call.1} parent=0 // loop_header_branch
    %15 = sbr.rel (%p13) target = $region8
  $region5: #{tpu_custom_call.1} parent=0 // loop_body
    %s17 = ssub.s32 %s12, 1
    %s18 = ssub.s32 %s12, 2
    %s19 = sadd.s32 %s12, 1
    %s20 = ssub.s32 %s12, %s19
    %p21 = scmp.eq.s32.totalorder %s20, 0
    %s23 = sadd.s32 %s22, 1
    %s24 = scalar_select %p21, %s22, %s23
    %p27 = pneg %p21
    %p28 = scmp.eq.s32.totalorder %s12, 1
    %p29 = por %p27, %p28
    %p30 = scmp.ne.s32.totalorder %s22, %s25
    %p31 = scmp.eq.s32.totalorder %s12, 0
    %p32 = por %p30, %p31
    %p33 = scmp.ne.s32.totalorder %s22, %s25
    %p34 = scmp.eq.s32.totalorder %s17, 1
    %p35 = por %p33, %p34
    %p36 = scmp.ne.s32.totalorder %s25, %s26
    %p37 = scmp.eq.s32.totalorder %s17, 0
    %p38 = por %p36, %p37
    %p39 = scmp.ne.s32.totalorder %s25, %s26
    %p40 = scmp.eq.s32.totalorder %s18, 1
    %p41 = por %p39, %p40
    %p43 = scmp.ne.s32.totalorder %s26, %s42
    %p44 = scmp.eq.s32.totalorder %s18, 0
    %p45 = por %p43, %p44
    %s46 = ssub.s32 %s12, %s19
    %p47 = scmp.eq.s32.totalorder %s46, 0
    %s49 = sadd.s32 %s48, 1
    %s50 = scalar_select %p47, %s48, %s49
    %p53 = pneg %p47
    %p54 = scmp.eq.s32.totalorder %s12, 1
    %p55 = por %p53, %p54
    %p56 = scmp.ne.s32.totalorder %s48, %s51
    %p57 = scmp.eq.s32.totalorder %s12, 0
    %p58 = por %p56, %p57
    %p59 = scmp.ne.s32.totalorder %s48, %s51
    %p60 = scmp.eq.s32.totalorder %s17, 1
    %p61 = por %p59, %p60
    %p62 = scmp.ne.s32.totalorder %s51, %s52
    %p63 = scmp.eq.s32.totalorder %s17, 0
    %p64 = por %p62, %p63
    %p65 = scmp.ne.s32.totalorder %s51, %s52
    %p66 = scmp.eq.s32.totalorder %s18, 1
    %p67 = por %p65, %p66
    %p69 = scmp.ne.s32.totalorder %s52, %s68
    %p70 = scmp.eq.s32.totalorder %s18, 0
    %p71 = por %p69, %p70
    %s73 = sadd.s32 %s72, 1
    %p76 = scmp.eq.s32.totalorder %s12, 1
    %p77 = scmp.ne.s32.totalorder %s72, %s74
    %p78 = scmp.eq.s32.totalorder %s12, 0
    %p79 = por %p77, %p78
    %p80 = scmp.ne.s32.totalorder %s72, %s74
    %p81 = scmp.eq.s32.totalorder %s17, 1
    %p82 = por %p80, %p81
    %p83 = scmp.ne.s32.totalorder %s74, %s75
    %p84 = scmp.eq.s32.totalorder %s17, 0
    %p85 = por %p83, %p84
    %p86 = scmp.ne.s32.totalorder %s74, %s75
    %p87 = scmp.eq.s32.totalorder %s18, 1
    %p88 = por %p86, %p87
    %p90 = scmp.ne.s32.totalorder %s75, %s89
    %p91 = scmp.eq.s32.totalorder %s18, 0
    %p92 = por %p90, %p91
    %s94 = sadd.s32 %s93, 1
    %p97 = scmp.eq.s32.totalorder %s12, 1
    %p98 = scmp.ne.s32.totalorder %s93, %s95
    %p99 = scmp.eq.s32.totalorder %s12, 0
    %p100 = por %p98, %p99
    %p101 = scmp.ne.s32.totalorder %s93, %s95
    %p102 = scmp.eq.s32.totalorder %s17, 1
    %p103 = por %p101, %p102
    %p104 = scmp.ne.s32.totalorder %s95, %s96
    %p105 = scmp.eq.s32.totalorder %s17, 0
    %p106 = por %p104, %p105
    %p107 = scmp.ne.s32.totalorder %s95, %s96
    %p108 = scmp.eq.s32.totalorder %s18, 1
    %p109 = por %p107, %p108
    %p111 = scmp.ne.s32.totalorder %s96, %s110
    %p112 = scmp.eq.s32.totalorder %s18, 0
    %p113 = por %p111, %p112
    %s115 = sadd.s32 %s114, 1
    %p118 = scmp.eq.s32.totalorder %s12, 1
    %p119 = scmp.ne.s32.totalorder %s114, %s116
    %p120 = scmp.eq.s32.totalorder %s12, 0
    %p121 = por %p119, %p120
    %p122 = scmp.ne.s32.totalorder %s114, %s116
    %p123 = scmp.eq.s32.totalorder %s17, 1
    %p124 = por %p122, %p123
    %p125 = scmp.ne.s32.totalorder %s116, %s117
    %p126 = scmp.eq.s32.totalorder %s17, 0
    %p127 = por %p125, %p126
    %p128 = scmp.ne.s32.totalorder %s116, %s117
    %p129 = scmp.eq.s32.totalorder %s18, 1
    %p130 = por %p128, %p129
    %p132 = scmp.ne.s32.totalorder %s117, %s131
    %p133 = scmp.eq.s32.totalorder %s18, 0
    %p134 = por %p132, %p133
    %s136 = sadd.s32 %s135, 1
    %p139 = scmp.eq.s32.totalorder %s12, 1
    %p140 = scmp.ne.s32.totalorder %s135, %s137
    %p141 = scmp.eq.s32.totalorder %s12, 0
    %p142 = por %p140, %p141
    %p143 = scmp.ne.s32.totalorder %s135, %s137
    %p144 = scmp.eq.s32.totalorder %s17, 1
    %p145 = por %p143, %p144
    %p146 = scmp.ne.s32.totalorder %s137, %s138
    %p147 = scmp.eq.s32.totalorder %s17, 0
    %p148 = por %p146, %p147
    %p149 = scmp.ne.s32.totalorder %s137, %s138
    %p150 = scmp.eq.s32.totalorder %s18, 1
    %p151 = por %p149, %p150
    %p153 = scmp.ne.s32.totalorder %s138, %s152
    %p154 = scmp.eq.s32.totalorder %s18, 0
    %p155 = por %p153, %p154
    %s156 = ssub.s32 %s12, %s19
    %p157 = scmp.eq.s32.totalorder %s156, 0
    %s159 = sadd.s32 %s158, 1
    %s160 = scalar_select %p157, %s158, %s159
    %p163 = pneg %p157
    %p164 = scmp.eq.s32.totalorder %s12, 1
    %p165 = por %p163, %p164
    %p166 = scmp.ne.s32.totalorder %s158, %s161
    %p167 = scmp.eq.s32.totalorder %s12, 0
    %p168 = por %p166, %p167
    %p169 = scmp.ne.s32.totalorder %s158, %s161
    %p170 = scmp.eq.s32.totalorder %s17, 1
    %p171 = por %p169, %p170
    %p172 = scmp.ne.s32.totalorder %s161, %s162
    %p173 = scmp.eq.s32.totalorder %s17, 0
    %p174 = por %p172, %p173
    %p175 = scmp.ne.s32.totalorder %s161, %s162
    %p176 = scmp.eq.s32.totalorder %s18, 1
    %p177 = por %p175, %p176
    %p179 = scmp.ne.s32.totalorder %s162, %s178
    %p180 = scmp.eq.s32.totalorder %s18, 0
    %p181 = por %p179, %p180
    %p182 = scmp.le.s32.totalorder 1, %s12
    %p183 = scmp.lt.s32.totalorder %s12, 3
    %p184 = pnand %p182, %p183
    %p185 = pneg %p184
    // Predicated region
    $region9: #{tpu_custom_call.1} parent=5 // pred_check
      _
    $region10: #{tpu_custom_call.1} parent=5 // pred_check_branch
      %187 = sbr.rel (%p184) target = $region12
    $region11: #{tpu_custom_call.1} parent=5 // pred_region
      %s188 = ssub.s32 %s12, 1
      // Predicated region
      $region13: #{tpu_custom_call.1} parent=11 // pred_check
        %p189 = pneg %p85
      $region14: #{tpu_custom_call.1} parent=11 // pred_check_branch
        %191 = sbr.rel (%p189) target = $region16
      $region15: #{tpu_custom_call.1} parent=11 // pred_region
        _
      $region16: #{tpu_custom_call.1} parent=11 // pred_fallthru
        _
      // Predicated region
      $region17: #{tpu_custom_call.1} parent=11 // pred_check
        %p192 = pneg %p106
      $region18: #{tpu_custom_call.1} parent=11 // pred_check_branch
        %194 = sbr.rel (%p192) target = $region20
      $region19: #{tpu_custom_call.1} parent=11 // pred_region
        _
      $region20: #{tpu_custom_call.1} parent=11 // pred_fallthru
        _
      // Predicated region
      $region21: #{tpu_custom_call.1} parent=11 // pred_check
        %p195 = pneg %p127
      $region22: #{tpu_custom_call.1} parent=11 // pred_check_branch
        %197 = sbr.rel (%p195) target = $region24
      $region23: #{tpu_custom_call.1} parent=11 // pred_region
        _
      $region24: #{tpu_custom_call.1} parent=11 // pred_fallthru
        _
      // Predicated region
      $region25: #{tpu_custom_call.1} parent=11 // pred_check
        %p198 = pneg %p148
      $region26: #{tpu_custom_call.1} parent=11 // pred_check_branch
        %200 = sbr.rel (%p198) target = $region28
      $region27: #{tpu_custom_call.1} parent=11 // pred_region
        _
      $region28: #{tpu_custom_call.1} parent=11 // pred_fallthru
        _
    $region12: #{tpu_custom_call.1} parent=5 // pred_fallthru
      _
    %p201 = scmp.lt.s32.totalorder %s12, 2
    // Predicated region
    $region29: #{tpu_custom_call.1} parent=5 // pred_check
      %p202 = pneg %p201
    $region30: #{tpu_custom_call.1} parent=5 // pred_check_branch
      %204 = sbr.rel (%p202) target = $region32
    $region31: #{tpu_custom_call.1} parent=5 // pred_region
      // Predicated region
      $region33: #{tpu_custom_call.1} parent=31 // pred_check
        %p205 = pneg %p32
      $region34: #{tpu_custom_call.1} parent=31 // pred_check_branch
        %207 = sbr.rel (%p205) target = $region36
      $region35: #{tpu_custom_call.1} parent=31 // pred_region
        %p208 = scmp.lt.s32.totalorder %s12, 1
        %s209 = scalar_select %p208, %s12, 1
        %s210 = smul.addr %s209, 48
        %s211 = smul.addr %s210, 8
        %s212 = scalar_lea.vmem %s0, %s211
      $region36: #{tpu_custom_call.1} parent=31 // pred_fallthru
        _
      // Predicated region
      $region37: #{tpu_custom_call.1} parent=31 // pred_check
        %p213 = pneg %p58
      $region38: #{tpu_custom_call.1} parent=31 // pred_check_branch
        %215 = sbr.rel (%p213) target = $region40
      $region39: #{tpu_custom_call.1} parent=31 // pred_region
        %p216 = scmp.lt.s32.totalorder %s12, 1
        %s217 = scalar_select %p216, %s12, 1
        %s218 = scalar_lea.vmem %s1, %s217
      $region40: #{tpu_custom_call.1} parent=31 // pred_fallthru
        _
    $region32: #{tpu_custom_call.1} parent=5 // pred_fallthru
      _
    %p219 = scmp.le.s32.totalorder 1, %s12
    %p220 = scmp.lt.s32.totalorder %s12, 3
    %p221 = pnand %p219, %p220
    %p222 = pneg %p221
    // Predicated region
    $region41: #{tpu_custom_call.1} parent=5 // pred_check
      _
    $region42: #{tpu_custom_call.1} parent=5 // pred_check_branch
      %224 = sbr.rel (%p221) target = $region44
    $region43: #{tpu_custom_call.1} parent=5 // pred_region
      %s225 = ssub.s32 %s12, 1
      %p226 = scmp.lt.s32.totalorder %s17, 1
      %s227 = scalar_select %p226, %s17, 1
      %s228 = smul.addr %s227, 48
      %s229 = smul.addr %s228, 8
      %s230 = scalar_lea.vmem %s0, %s229
      %p231 = pneg %p38
      %p232 = pneg %p35
      %p233 = scmp.lt.s32.totalorder %s17, 1
      %s234 = scalar_select %p233, %s17, 1
      %s235 = scalar_lea.vmem %s1, %s234
      %p236 = pneg %p64
      %p237 = pneg %p61
      %p238 = pneg %p85
      %p239 = pneg %p82
      %p240 = pneg %p106
      %p241 = pneg %p103
      %p242 = pneg %p127
      %p243 = pneg %p124
      %p244 = pneg %p148
      %p245 = pneg %p145
      %p246 = pneg %p174
      %p247 = pneg %p171
      %p248 = scmp.lt.s32.totalorder %s17, 1
      %s249 = scalar_select %p248, %s17, 1
      %s250 = smul.addr %s249, 3
      %s251 = smul.addr %s250, 8
      %s252 = scalar_lea.vmem %s6, %s251
      %p253 = scmp.lt.s32.totalorder %s17, 1
      %s254 = scalar_select %p253, %s17, 1
      %s255 = smul.addr %s254, 48
      %s256 = smul.addr %s255, 8
      %s257 = scalar_lea.vmem %s0, %s256
      %p258 = scmp.lt.s32.totalorder %s17, 1
      %s259 = scalar_select %p258, %s17, 1
      %s260 = scalar_lea.vmem %s1, %s259
      %p261 = scmp.lt.s32.totalorder %s17, 1
      %s262 = scalar_select %p261, %s17, 1
      %s263 = smul.addr %s262, 3
      %s264 = smul.addr %s263, 8
      %s265 = scalar_lea.vmem %s6, %s264
      %v266 = vld [vmem:[%s257] sm:$0xff]
      %v267 = vld [vmem:[%s257 + $0x8] sm:$0xff]
      %v268 = vld [vmem:[%s257 + $0x10] sm:$0x1]
      %v269 = vld [vmem:[%s257 + $0x18] sm:$0xff]
      %v270 = vld [vmem:[%s257 + $0x20] sm:$0xff]
      %v271 = vld [vmem:[%s257 + $0x28] sm:$0x1]
      %v272 = vld [vmem:[%s257 + $0x30] sm:$0xff]
      %v273 = vld [vmem:[%s257 + $0x38] sm:$0xff]
      %v274 = vld [vmem:[%s257 + $0x40] sm:$0x1]
      %v275 = vld [vmem:[%s257 + $0x48] sm:$0xff]
      %v276 = vld [vmem:[%s257 + $0x50] sm:$0xff]
      %v277 = vld [vmem:[%s257 + $0x58] sm:$0x1]
      %v278 = vld [vmem:[%s257 + $0x60] sm:$0xff]
      %v279 = vld [vmem:[%s257 + $0x68] sm:$0xff]
      %v280 = vld [vmem:[%s257 + $0x70] sm:$0x1]
      %v281 = vld [vmem:[%s257 + $0x78] sm:$0xff]
      %v282 = vld [vmem:[%s257 + $0x80] sm:$0xff]
      %v283 = vld [vmem:[%s257 + $0x88] sm:$0x1]
      %v284 = vld [vmem:[%s257 + $0x90] sm:$0xff]
      %v285 = vld [vmem:[%s257 + $0x98] sm:$0xff]
      %v286 = vld [vmem:[%s257 + $0xa0] sm:$0x1]
      %v287 = vld [vmem:[%s257 + $0xa8] sm:$0xff]
      %v288 = vld [vmem:[%s257 + $0xb0] sm:$0xff]
      %v289 = vld [vmem:[%s257 + $0xb8] sm:$0x1]
      %v290 = vld [vmem:[%s257 + $0xc0] sm:$0xff]
      %v291 = vld [vmem:[%s257 + $0xc8] sm:$0xff]
      %v292 = vld [vmem:[%s257 + $0xd0] sm:$0x1]
      %v293 = vld [vmem:[%s257 + $0xd8] sm:$0xff]
      %v294 = vld [vmem:[%s257 + $0xe0] sm:$0xff]
      %v295 = vld [vmem:[%s257 + $0xe8] sm:$0x1]
      %v296 = vld [vmem:[%s257 + $0xf0] sm:$0xff]
      %v297 = vld [vmem:[%s257 + $0xf8] sm:$0xff]
      %v298 = vld [vmem:[%s257 + $0x100] sm:$0x1]
      %v299 = vld [vmem:[%s257 + $0x108] sm:$0xff]
      %v300 = vld [vmem:[%s257 + $0x110] sm:$0xff]
      %v301 = vld [vmem:[%s257 + $0x118] sm:$0x1]
      %v302 = vld [vmem:[%s257 + $0x120] sm:$0xff]
      %v303 = vld [vmem:[%s257 + $0x128] sm:$0xff]
      %v304 = vld [vmem:[%s257 + $0x130] sm:$0x1]
      %v305 = vld [vmem:[%s257 + $0x138] sm:$0xff]
      %v306 = vld [vmem:[%s257 + $0x140] sm:$0xff]
      %v307 = vld [vmem:[%s257 + $0x148] sm:$0x1]
      %v308 = vld [vmem:[%s257 + $0x150] sm:$0xff]
      %v309 = vld [vmem:[%s257 + $0x158] sm:$0xff]
      %v310 = vld [vmem:[%s257 + $0x160] sm:$0x1]
      %v311 = vld [vmem:[%s257 + $0x168] sm:$0xff]
      %v312 = vld [vmem:[%s257 + $0x170] sm:$0xff]
      %v313 = vld [vmem:[%s257 + $0x178] sm:$0x1]
      %vm314 = vcmask 130048
      %v315 = vsel %vm314, %v266, 0.0
      %v316 = vsel %vm314, %v269, 0.0
      %v317 = vadd.f32 %v315, %v316
      %v318 = vsel %vm314, %v272, 0.0
      %v319 = vadd.f32 %v317, %v318
      %v320 = vsel %vm314, %v275, 0.0
      %v321 = vadd.f32 %v319, %v320
      %v322 = vsel %vm314, %v278, 0.0
      %v323 = vadd.f32 %v321, %v322
      %v324 = vsel %vm314, %v281, 0.0
      %v325 = vadd.f32 %v323, %v324
      %v326 = vsel %vm314, %v284, 0.0
      %v327 = vadd.f32 %v325, %v326
      %v328 = vsel %vm314, %v287, 0.0
      %v329 = vadd.f32 %v327, %v328
      %v330 = vsel %vm314, %v290, 0.0
      %v331 = vadd.f32 %v329, %v330
      %v332 = vsel %vm314, %v293, 0.0
      %v333 = vadd.f32 %v331, %v332
      %v334 = vsel %vm314, %v296, 0.0
      %v335 = vadd.f32 %v333, %v334
      %v336 = vsel %vm314, %v299, 0.0
      %v337 = vadd.f32 %v335, %v336
      %v338 = vsel %vm314, %v302, 0.0
      %v339 = vadd.f32 %v337, %v338
      %v340 = vsel %vm314, %v305, 0.0
      %v341 = vadd.f32 %v339, %v340
      %v342 = vsel %vm314, %v308, 0.0
      %v343 = vadd.f32 %v341, %v342
      %v344 = vsel %vm314, %v311, 0.0
      %v345 = vadd.f32 %v343, %v344
      %v346 = vsel %vm314, %v267, 0.0
      %v347 = vsel %vm314, %v270, 0.0
      %v348 = vadd.f32 %v346, %v347
      %v349 = vsel %vm314, %v273, 0.0
      %v350 = vadd.f32 %v348, %v349
      %v351 = vsel %vm314, %v276, 0.0
      %v352 = vadd.f32 %v350, %v351
      %v353 = vsel %vm314, %v279, 0.0
      %v354 = vadd.f32 %v352, %v353
      %v355 = vsel %vm314, %v282, 0.0
      %v356 = vadd.f32 %v354, %v355
      %v357 = vsel %vm314, %v285, 0.0
      %v358 = vadd.f32 %v356, %v357
      %v359 = vsel %vm314, %v288, 0.0
      %v360 = vadd.f32 %v358, %v359
      %v361 = vsel %vm314, %v291, 0.0
      %v362 = vadd.f32 %v360, %v361
      %v363 = vsel %vm314, %v294, 0.0
      %v364 = vadd.f32 %v362, %v363
      %v365 = vsel %vm314, %v297, 0.0
      %v366 = vadd.f32 %v364, %v365
      %v367 = vsel %vm314, %v300, 0.0
      %v368 = vadd.f32 %v366, %v367
      %v369 = vsel %vm314, %v303, 0.0
      %v370 = vadd.f32 %v368, %v369
      %v371 = vsel %vm314, %v306, 0.0
      %v372 = vadd.f32 %v370, %v371
      %v373 = vsel %vm314, %v309, 0.0
      %v374 = vadd.f32 %v372, %v373
      %v375 = vsel %vm314, %v312, 0.0
      %v376 = vadd.f32 %v374, %v375
      %vm377 = vcmask 122880
      %v378 = vsel %vm377, %v268, 0.0
      %v379 = vsel %vm377, %v271, 0.0
      %v380 = vadd.f32 %v378, %v379
      %v381 = vsel %vm377, %v274, 0.0
      %v382 = vadd.f32 %v380, %v381
      %v383 = vsel %vm377, %v277, 0.0
      %v384 = vadd.f32 %v382, %v383
      %v385 = vsel %vm377, %v280, 0.0
      %v386 = vadd.f32 %v384, %v385
      %v387 = vsel %vm377, %v283, 0.0
      %v388 = vadd.f32 %v386, %v387
      %v389 = vsel %vm377, %v286, 0.0
      %v390 = vadd.f32 %v388, %v389
      %v391 = vsel %vm377, %v289, 0.0
      %v392 = vadd.f32 %v390, %v391
      %v393 = vsel %vm377, %v292, 0.0
      %v394 = vadd.f32 %v392, %v393
      %v395 = vsel %vm377, %v295, 0.0
      %v396 = vadd.f32 %v394, %v395
      %v397 = vsel %vm377, %v298, 0.0
      %v398 = vadd.f32 %v396, %v397
      %v399 = vsel %vm377, %v301, 0.0
      %v400 = vadd.f32 %v398, %v399
      %v401 = vsel %vm377, %v304, 0.0
      %v402 = vadd.f32 %v400, %v401
      %v403 = vsel %vm377, %v307, 0.0
      %v404 = vadd.f32 %v402, %v403
      %v405 = vsel %vm377, %v310, 0.0
      %v406 = vadd.f32 %v404, %v405
      %v407 = vsel %vm377, %v313, 0.0
      %v408 = vadd.f32 %v406, %v407
      %v409 = vmul.f32 %v345, 0.0625
      %v410 = vmul.f32 %v376, 0.0625
      %v411 = vmul.f32 %v408, 0.0625
      %v412 = vld [vmem:[%s2] sm:$0xff]
      %v413 = vld [vmem:[%s2 + $0x8] sm:$0xff]
      %v414 = vld [vmem:[%s3] sm:$0x1]
      %v416 = vlaneseq
      %v417 = vshrl.u32 %v416, 7
      %v418 = vsub.s32 0, %v417
      %v419 = vrot.slane %v414, %v418
      %v422 = vsel %vm314, %v409, 0
      %v425 = vsel %vm314, %v410, 0
      %v428 = vsel %vm314, %v411, 0
      %430 = vmatprep.subr.mxu0 0.0
      %431 = vmatpush1.msra.mxu0 0.0
      %432 = vmatprep.subr.mxu0 0.0
      %433 = vmatpush1.msra.mxu0 0.0
      %434 = vmatprep.subr.mxu0 0.0
      %435 = vmatpush1.msra.mxu0 0.0
      %436 = vmatprep.subr.mxu0 0.0
      %437 = vmatpush1.msra.mxu0 0.0
      %438 = vmatprep.subr.mxu0 0.0
      %439 = vmatpush1.msra.mxu0 0.0
      %440 = vmatprep.subr.mxu0 0.0
      %441 = vmatpush1.msra.mxu0 0.0
      %442 = vmatprep.subr.mxu0 0.0
      %443 = vmatpush1.msra.mxu0 0.0
      %444 = vmatprep.subr.mxu0 0.0
      %445 = vmatpush1.msra.mxu0 0.0
      %446 = vmatprep.subr.mxu0 0.0
      %447 = vmatpush1.msra.mxu0 0.0
      %448 = vmatprep.subr.mxu0 0.0
      %449 = vmatpush1.msra.mxu0 0.0
      %450 = vmatprep.subr.mxu0 0.0
      %451 = vmatpush1.msra.mxu0 0.0
      %452 = vmatprep.subr.mxu0 0.0
      %453 = vmatpush1.msra.mxu0 0.0
      %454 = vmatprep.subr.mxu0 0.0
      %455 = vmatpush1.msra.mxu0 0.0
      %456 = vmatprep.subr.mxu0 0.0
      %457 = vmatpush1.msra.mxu0 0.0
      %458 = vmatprep.subr.mxu0 0.0
      %459 = vmatpush1.msra.mxu0 %v413
      %460 = vmatprep.subr.mxu0 0.0
      %461 = vmatpush1.msra.mxu0 %v412
      %462 = vmatprep.subr.mxu0 0.0
      %463 = vmatpush2.msra.mxu0 0.0
      %464 = vmatprep.subr.mxu0 0.0
      %465 = vmatpush2.msra.mxu0 0.0
      %466 = vmatprep.subr.mxu0 0.0
      %467 = vmatpush2.msra.mxu0 0.0
      %468 = vmatprep.subr.mxu0 0.0
      %469 = vmatpush2.msra.mxu0 0.0
      %470 = vmatprep.subr.mxu0 0.0
      %471 = vmatpush2.msra.mxu0 0.0
      %472 = vmatprep.subr.mxu0 0.0
      %473 = vmatpush2.msra.mxu0 0.0
      %474 = vmatprep.subr.mxu0 0.0
      %475 = vmatpush2.msra.mxu0 0.0
      %476 = vmatprep.subr.mxu0 0.0
      %477 = vmatpush2.msra.mxu0 0.0
      %478 = vmatprep.subr.mxu0 0.0
      %479 = vmatpush2.msra.mxu0 0.0
      %480 = vmatprep.subr.mxu0 0.0
      %481 = vmatpush2.msra.mxu0 0.0
      %482 = vmatprep.subr.mxu0 0.0
      %483 = vmatpush2.msra.mxu0 0.0
      %484 = vmatprep.subr.mxu0 0.0
      %485 = vmatpush2.msra.mxu0 0.0
      %486 = vmatprep.subr.mxu0 0.0
      %487 = vmatpush2.msra.mxu0 0.0
      %488 = vmatprep.subr.mxu0 0.0
      %489 = vmatpush2.msra.mxu0 0.0
      %490 = vmatprep.subr.mxu0 0.0
      %491 = vmatpush2.msra.mxu0 0.0
      %492 = vmatprep.subr.mxu0 0.0
      %493 = vmatpush2.msra.mxu0 0.0
      %494 = vmatprep.mubr.f32.mxu0 0.0
      %495 = vmatmul.mubr.f32.gmra.mxu0 %v422
      %v496 = vpop.f32.mrf.mxu0
      %v497 = vadd.f32 %v419, %v496
      %v498 = vpop.f32.mrf.mxu0
      %499 = vmatprep.mubr.f32.mxu0 0.0
      %500 = vmatmul.mubr.f32.gmra.mxu0 %v425
      %v501 = vpop.f32.mrf.mxu0
      %v502 = vadd.f32 %v419, %v501
      %v503 = vpop.f32.mrf.mxu0
      %504 = vmatprep.mubr.f32.mxu0 0.0
      %505 = vmatmul.mubr.f32.gmra.mxu0 %v428
      %v506 = vpop.f32.mrf.mxu0
      %v507 = vadd.f32 %v419, %v506
      %v508 = vpop.f32.mrf.mxu0
      %509 = vdwg.mxu0
      %vm510 = vcmask 261120
      %v511 = vsel %vm510, %v497, 0.0
      %512 = vadd.xlane.f32.xlu0 %v511
      %v513 = vpop.xlane.xlu0 %512
      %v514 = vsel %vm510, %v502, 0.0
      %515 = vadd.xlane.f32.xlu0 %v514
      %v516 = vpop.xlane.xlu0 %515
      %vm517 = vcmask 253952
      %v518 = vsel %vm517, %v507, 0.0
      %519 = vadd.xlane.f32.xlu0 %v518
      %v520 = vpop.xlane.xlu0 %519
      %v521 = vrcp.pop 32.0
      %v522 = vmul.f32 %v513, %v521
      %v523 = vmul.f32 %v516, %v521
      %v524 = vmul.f32 %v520, %v521
      %v525 = vsub.f32 %v497, %v522
      %v526 = vsub.f32 %v502, %v523
      %v527 = vsub.f32 %v507, %v524
      %v528 = vmul.f32 %v525, %v525
      %v529 = vmul.f32 %v526, %v526
      %v530 = vmul.f32 %v527, %v527
      %v531 = vsel %vm510, %v528, 0.0
      %532 = vadd.xlane.f32.xlu0 %v531
      %v533 = vpop.xlane.xlu0 %532
      %v534 = vsel %vm510, %v529, 0.0
      %535 = vadd.xlane.f32.xlu0 %v534
      %v536 = vpop.xlane.xlu0 %535
      %v537 = vsel %vm517, %v530, 0.0
      %538 = vadd.xlane.f32.xlu0 %v537
      %v539 = vpop.xlane.xlu0 %538
      %v540 = vmul.f32 %v533, %v521
      %v541 = vmul.f32 %v536, %v521
      %v542 = vmul.f32 %v539, %v521
      %v543 = vadd.f32 %v540, 1e-06
      %v544 = vadd.f32 %v541, 1e-06
      %v545 = vadd.f32 %v542, 1e-06
      %v546 = vrsqrt.pop %v543
      %v547 = vrsqrt.pop %v544
      %v548 = vrsqrt.pop %v545
      %v549 = vmul.f32 %v525, %v546
      %v550 = vmul.f32 %v526, %v547
      %v551 = vmul.f32 %v527, %v548
      %v552 = vld [vmem:[%s4] sm:$0x1]
      %v554 = vlaneseq
      %v555 = vshrl.u32 %v554, 7
      %v556 = vsub.s32 0, %v555
      %v557 = vrot.slane %v552, %v556
      %v559 = vmul.f32 %v549, %v557
      %v560 = vmul.f32 %v550, %v557
      %v561 = vmul.f32 %v551, %v557
      %v562 = vld [vmem:[%s5] sm:$0x1]
      %v564 = vlaneseq
      %v565 = vshrl.u32 %v564, 7
      %v566 = vsub.s32 0, %v565
      %v567 = vrot.slane %v562, %v566
      %v569 = vadd.f32 %v559, %v567
      %v570 = vadd.f32 %v560, %v567
      %v571 = vadd.f32 %v561, %v567
      %v572 = vmul.f32 %v569, 0.5
      %v573 = vmul.f32 %v570, 0.5
      %v574 = vmul.f32 %v571, 0.5
      %v575 = vmul.f32 %v569, 0.70710677
      %v576 = vmul.f32 %v570, 0.70710677
      %v577 = vmul.f32 %v571, 0.70710677
      %v578 = vand.u32 2147483647, %v575
      %v579 = vand.u32 2147483647, %v576
      %v580 = vand.u32 2147483647, %v577
      %v581 = vmul.f32 %v578, 0.3275911
      %v582 = vmul.f32 %v579, 0.3275911
      %v583 = vmul.f32 %v580, 0.3275911
      %v584 = vadd.f32 %v581, 1.0
      %v585 = vadd.f32 %v582, 1.0
      %v586 = vadd.f32 %v583, 1.0
      %v587 = vrcp.pop %v584
      %v588 = vmul.f32 1.0, %v587
      %v589 = vrcp.pop %v585
      %v590 = vmul.f32 1.0, %v589
      %v591 = vrcp.pop %v586
      %v592 = vmul.f32 1.0, %v591
      %v593 = vmul.f32 %v588, 1.0614054
      %v594 = vmul.f32 %v590, 1.0614054
      %v595 = vmul.f32 %v592, 1.0614054
      %v596 = vadd.f32 %v593, -1.4531521
      %v597 = vadd.f32 %v594, -1.4531521
      %v598 = vadd.f32 %v595, -1.4531521
      %v599 = vmul.f32 %v596, %v588
      %v600 = vmul.f32 %v597, %v590
      %v601 = vmul.f32 %v598, %v592
      %v602 = vadd.f32 %v599, 1.4214138
      %v603 = vadd.f32 %v600, 1.4214138
      %v604 = vadd.f32 %v601, 1.4214138
      %v605 = vmul.f32 %v602, %v588
      %v606 = vmul.f32 %v603, %v590
      %v607 = vmul.f32 %v604, %v592
      %v608 = vadd.f32 %v605, -0.28449672
      %v609 = vadd.f32 %v606, -0.28449672
      %v610 = vadd.f32 %v607, -0.28449672
      %v611 = vmul.f32 %v608, %v588
      %v612 = vmul.f32 %v609, %v590
      %v613 = vmul.f32 %v610, %v592
      %v614 = vadd.f32 %v611, 0.2548296
      %v615 = vadd.f32 %v612, 0.2548296
      %v616 = vadd.f32 %v613, 0.2548296
      %v617 = vmul.f32 %v614, %v588
      %v618 = vmul.f32 %v615, %v590
      %v619 = vmul.f32 %v616, %v592
      %v620 = vsub.f32 0.0, %v578
      %v621 = vsub.f32 0.0, %v579
      %v622 = vsub.f32 0.0, %v580
      %v623 = vmul.f32 %v620, %v578
      %v624 = vmul.f32 %v621, %v579
      %v625 = vmul.f32 %v622, %v580
      %v626 = vmul.f32 %v623, 1.442695
      %v627 = vpow.pop %v626
      %v628 = vmul.f32 %v624, 1.442695
      %v629 = vpow.pop %v628
      %v630 = vmul.f32 %v625, 1.442695
      %v631 = vpow.pop %v630
      %v632 = vmul.f32 %v617, %v627
      %v633 = vmul.f32 %v618, %v629
      %v634 = vmul.f32 %v619, %v631
      %v635 = vsub.f32 1.0, %v632
      %v636 = vsub.f32 1.0, %v633
      %v637 = vsub.f32 1.0, %v634
      %vm638 = vcmp.ge.f32.partialorder %v575, 0.0
      %vm639 = vcmp.ge.f32.partialorder %v576, 0.0
      %vm640 = vcmp.ge.f32.partialorder %v577, 0.0
      %v641 = vsub.f32 0.0, %v635
      %v642 = vsub.f32 0.0, %v636
      %v643 = vsub.f32 0.0, %v637
      %v644 = vsel %vm638, %v635, %v641
      %v645 = vsel %vm639, %v636, %v642
      %v646 = vsel %vm640, %v637, %v643
      %v647 = vadd.f32 %v644, 1.0
      %v648 = vadd.f32 %v645, 1.0
      %v649 = vadd.f32 %v646, 1.0
      %v650 = vmul.f32 %v572, %v647
      %v651 = vmul.f32 %v573, %v648
      %v652 = vmul.f32 %v574, %v649
      %v653 = vlaneseq
      %v654 = vshrl.u32 %v653, 7
      %v655 = vadd.s32 %v654, 8
      %v656 = vadd.s32 %v654, 16
      %vm657 = vcmp.eq.s32.totalorder %v654, 0
      %vm658 = vcmp.eq.s32.totalorder %v655, 0
      %vm659 = vcmp.eq.s32.totalorder %v656, 0
      %v660 = vld [vmem:[%s260] sm:$0x1]
      %v661 = vsel %vm657, 1, 0
      %v662 = vsel %vm658, 1, 0
      %v663 = vsel %vm659, 1, 0
      %vm664 = vcmp.eq.s32.totalorder %v661, 1
      %vm665 = vcmp.eq.s32.totalorder %v662, 1
      %vm666 = vcmp.eq.s32.totalorder %v663, 1
      %v668 = vlaneseq
      %v669 = vshrl.u32 %v668, 7
      %v670 = vsub.s32 0, %v669
      %v671 = vrot.slane %v660, %v670
      %v673 = vsel %vm664, %v671, %v650
      %v674 = vsel %vm665, %v671, %v651
      %v675 = vsel %vm666, %v671, %v652
      %676 = vst.msk [vmem:[%s265] sm:$0xff] %vm510, %v673
      %677 = vst.msk [vmem:[%s265 + $0x8] sm:$0xff] %vm510, %v674
      %678 = vst.msk [vmem:[%s265 + $0x10] sm:$0x1] %vm517, %v675
      %p679 = scmp.lt.s32.totalorder %s17, 1
      %s680 = scalar_select %p679, %s17, 1
      %s681 = smul.addr %s680, 3
      %s682 = smul.addr %s681, 8
      %s683 = scalar_lea.vmem %s6, %s682
      // Predicated region
      $region45: #{tpu_custom_call.1} parent=43 // pred_check
        %p684 = pneg %p171
      $region46: #{tpu_custom_call.1} parent=43 // pred_check_branch
        %686 = sbr.rel (%p684) target = $region48
      $region47: #{tpu_custom_call.1} parent=43 // pred_region
        _
      $region48: #{tpu_custom_call.1} parent=43 // pred_fallthru
        _
    $region44: #{tpu_custom_call.1} parent=5 // pred_fallthru
      _
    %p687 = scmp.le.s32.totalorder 2, %s12
    // Predicated region
    $region49: #{tpu_custom_call.1} parent=5 // pred_check
      %p688 = pneg %p687
    $region50: #{tpu_custom_call.1} parent=5 // pred_check_branch
      %690 = sbr.rel (%p688) target = $region52
    $region51: #{tpu_custom_call.1} parent=5 // pred_region
      %s691 = ssub.s32 %s12, 2
      // Predicated region
      $region53: #{tpu_custom_call.1} parent=51 // pred_check
        %p692 = pneg %p177
      $region54: #{tpu_custom_call.1} parent=51 // pred_check_branch
        %694 = sbr.rel (%p692) target = $region56
      $region55: #{tpu_custom_call.1} parent=51 // pred_region
        %p695 = scmp.lt.s32.totalorder %s18, 1
        %s696 = scalar_select %p695, %s18, 1
        %s697 = smul.addr %s696, 3
        %s698 = smul.addr %s697, 8
        %s699 = scalar_lea.vmem %s6, %s698
      $region56: #{tpu_custom_call.1} parent=51 // pred_fallthru
        _
    $region52: #{tpu_custom_call.1} parent=5 // pred_fallthru
      _
  $region6: #{tpu_custom_call.1} parent=0 // loop_footer
    %s16 = sadd.s32 1, %s12
  $region7: #{tpu_custom_call.1} parent=0 // loop_footer_branch
    %11 = sbr.rel target = $region3
  $region8: #{tpu_custom_call.1} parent=0 // loop_exit
    _

</llo_original>
